<compile_context>
chip_gen: v7x
topology: tpu7x:2x2x1
jax: 0.10.0
libtpu: 0.0.40
codegen_flags: <defaults>
</compile_context>

<pallas_src>
import math

import jax
import jax.numpy as jnp
from jax import lax
from jax.experimental import pallas as pl
from jax.experimental.pallas import tpu as pltpu


def _decoder_kernel(x_ref, w_ref, b_ref, o_ref):
    # x_ref: (TM, H) tile of rows, native dtype; w_ref: (1, H); b_ref: (1, 1);
    # o_ref: (1, 1, TM) lane-dense output block.
    #
    # MXU contraction over H: (1, H) x (TM, H)^T -> (1, TM), f32 accumulation.
    z = lax.dot_general(
        w_ref[...], x_ref[...],
        dimension_numbers=(((1,), (1,)), ((), ())),
        preferred_element_type=jnp.float32,
        precision=lax.Precision.HIGHEST,
    ) + b_ref[...].astype(jnp.float32)                     # (1, TM)

    # Sigmoid on TM elements only (not TM*H) -- negligible VPU/EUP work.
    # NOTE: no approx reciprocal here; the test tolerance is tight.
    y = 1.0 / (1.0 + jnp.exp(-z))
    o_ref[...] = y[None].astype(o_ref.dtype)               # (1, 1, TM)


def _pick_tile_rows(m, h, itemsize):
    """Rows per grid step.

    Budget counts VMEM with the last dim lane-padded to 128.  ~4 MiB of padded
    x per step (double-buffered ~8 MiB) hits >=80-90% of the HBM roofline on
    v5e/v6e and stays within every generation's default scoped VMEM; the grid
    is kept at >= ~8 steps (when possible) so v7x megacore gets both cores busy.
    """
    if m <= 8:
        return max(1, m)                              # single full block
    h_pad = max(128, ((h + 127) // 128) * 128)        # VMEM lane padding
    budget = 4 * 1024 * 1024                          # ~4 MiB padded x / step
    tm = max(8, budget // (h_pad * itemsize))
    # Keep several grid steps so the "parallel" axis can be sharded across the
    # two v7x TensorCores.
    tm = min(tm, max(8, -(-m // 8)))
    if tm >= 128:
        tm = (tm // 128) * 128                        # lane-dense output block
    else:
        tm = (tm // 8) * 8                            # sublane alignment
    return tm


def binary_decoder(x, weight, bias):
    """sigmoid(x @ weight.T + bias).  x: (..., H), weight: (1, H), bias: (1,)."""
    h = x.shape[-1]
    assert weight.shape == (1, h)
    lead = x.shape[:-1]
    m = int(math.prod(lead)) if lead else 1

    x2 = x.reshape(m, h)                              # no pad, no dtype cast
    w2 = weight.reshape(1, h)
    b2 = bias.reshape(1, 1)

    tm = _pick_tile_rows(m, h, x2.dtype.itemsize)
    num_tiles = pl.cdiv(m, tm)

    out = pl.pallas_call(
        _decoder_kernel,
        out_shape=jax.ShapeDtypeStruct((num_tiles, 1, tm), x.dtype),
        grid_spec=pltpu.PrefetchScalarGridSpec(
            num_scalar_prefetch=0,
            grid=(num_tiles,),
            in_specs=[
                pl.BlockSpec((tm, h), lambda i: (i, 0)),   # streamed row tile
                pl.BlockSpec((1, h), lambda i: (0, 0)),    # weight, resident
                pl.BlockSpec((1, 1), lambda i: (0, 0)),    # bias, resident
            ],
            out_specs=pl.BlockSpec((1, 1, tm), lambda i: (i, 0, 0)),
        ),
        compiler_params=pltpu.CompilerParams(
            dimension_semantics=("parallel",)),            # megacore on v7x
    )(x2, w2, b2)

    # Drop garbage lanes from a possible partial last tile, restore (..., 1).
    return out.reshape(-1)[:m].reshape(*lead, 1)


def _reference(x, weight, bias):
    # Pure elementwise-f32 reference (no matmul) so it is exact f32 regardless
    # of the backend's default matmul precision.
    xf = x.astype(jnp.float32)
    wf = weight.astype(jnp.float32)[0]                # (H,)
    bf = bias.astype(jnp.float32)
    z = jnp.sum(xf * wf, axis=-1, keepdims=True) + bf
    y = 1.0 / (1.0 + jnp.exp(-z))
    return y.astype(x.dtype)


if __name__ == "__main__":
    key = jax.random.PRNGKey(0)
    kx, kw, kb = jax.random.split(key, 3)

    # Small shapes consistent with the module: batch=2, seq=8, hidden=32
    # (params['output_size'] == 32).
    B, S, H = 2, 8, 32
    x = jax.random.normal(kx, (B, S, H), dtype=jnp.float32)

    # PyTorch Linear default init: U(-1/sqrt(H), 1/sqrt(H)).
    bound = 1.0 / math.sqrt(H)
    w = jax.random.uniform(kw, (1, H), minval=-bound, maxval=bound,
                           dtype=jnp.float32)
    b = jax.random.uniform(kb, (1,), minval=-bound, maxval=bound,
                           dtype=jnp.float32)

    out = jax.block_until_ready(binary_decoder(x, w, b))
    ref = jax.block_until_ready(_reference(x, w, b))

    assert out.shape == (B, S, 1), out.shape
    # Slightly relaxed vs pure-f32: the MXU (HIGHEST precision) accumulates in
    # a different order than the elementwise-f32 reference (few-ulp deltas).
    assert jnp.allclose(out, ref, rtol=1e-5, atol=1e-5), (out, ref)
    print("KERNEL_OK")
</pallas_src>

<mosaic_0001>
module attributes {stable_mosaic.version = 11 : i64} {
  func.func @_decoder_kernel(%arg0: i32, %arg1: memref<8x32xf32, #tpu.memory_space<vmem>>, %arg2: memref<1x32xf32, #tpu.memory_space<vmem>>, %arg3: memref<1x1xf32, #tpu.memory_space<vmem>>, %arg4: memref<1x1x8xf32, #tpu.memory_space<vmem>>) attributes {dimension_semantics = [#tpu.dimension_semantics<parallel>], iteration_bounds = array<i64: 2>, scalar_prefetch = 0 : i64, scratch_operands = 0 : i64, tpu.core_type = #tpu.core_type<tc>, window_params = [{transform_indices = @transform_0, window_bounds = array<i64: 8, 32>}, {pipeline_mode = #tpu.pipeline_mode<synchronous>, transform_indices = @transform_1, window_bounds = array<i64: 1, 32>}, {pipeline_mode = #tpu.pipeline_mode<synchronous>, transform_indices = @transform_2, window_bounds = array<i64: 1, 1>}, {transform_indices = @transform_3, window_bounds = array<i64: 1, 1, 8>}]} {
    %c0 = arith.constant 0 : index
    %c0_0 = arith.constant 0 : index
    %0 = vector.load %arg2[%c0, %c0_0] : memref<1x32xf32, #tpu.memory_space<vmem>>, vector<1x32xf32>
    %c0_1 = arith.constant 0 : index
    %c0_2 = arith.constant 0 : index
    %1 = vector.load %arg1[%c0_1, %c0_2] : memref<8x32xf32, #tpu.memory_space<vmem>>, vector<8x32xf32>
    %cst = arith.constant dense<0.000000e+00> : vector<1x8xf32>
    %2 = tpu.matmul %0, %1, %cst {dimension_numbers = #tpu.dot_dimension_numbers<[1], [1], [0], [0], [0, 0, 1, 0], [], []>, precision = #tpu.contract_precision<fp32>} : vector<1x32xf32>, vector<8x32xf32>, vector<1x8xf32> -> vector<1x8xf32>
    %c0_3 = arith.constant 0 : index
    %c0_4 = arith.constant 0 : index
    %3 = vector.load %arg3[%c0_3, %c0_4] : memref<1x1xf32, #tpu.memory_space<vmem>>, vector<1x1xf32>
    %4 = vector.broadcast %3 : vector<1x1xf32> to vector<1x8xf32>
    %5 = arith.addf %2, %4 : vector<1x8xf32>
    %cst_5 = arith.constant 0.000000e+00 : f32
    %6 = vector.broadcast %cst_5 : f32 to vector<1x8xf32>
    %7 = arith.subf %6, %5 : vector<1x8xf32>
    %8 = math.exp %7 : vector<1x8xf32>
    %cst_6 = arith.constant 1.000000e+00 : f32
    %9 = vector.broadcast %cst_6 : f32 to vector<1x8xf32>
    %10 = arith.addf %9, %8 : vector<1x8xf32>
    %cst_7 = arith.constant 1.000000e+00 : f32
    %11 = vector.broadcast %cst_7 : f32 to vector<1x8xf32>
    %12 = arith.divf %11, %10 : vector<1x8xf32>
    %13 = vector.shape_cast %12 : vector<1x8xf32> to vector<1x1x8xf32>
    %c0_8 = arith.constant 0 : index
    %c0_9 = arith.constant 0 : index
    %c0_10 = arith.constant 0 : index
    %14 = vector.load %arg4[%c0_8, %c0_9, %c0_10] : memref<1x1x8xf32, #tpu.memory_space<vmem>>, vector<1x1x8xf32>
    tpu.vector_store %arg4[%c0_8, %c0_9, %c0_10], %13 {strides = array<i32>} : memref<1x1x8xf32, #tpu.memory_space<vmem>>, vector<1x1x8xf32>,
    return
  }
  func.func @transform_0(%arg0: i32) -> (i32, i32) {
    %c0_i32 = arith.constant 0 : i32
    %c0_i32_0 = arith.constant 0 : i32
    return %arg0, %c0_i32 : i32, i32
  }
  func.func @transform_1(%arg0: i32) -> (i32, i32) {
    %c0_i32 = arith.constant 0 : i32
    %c0_i32_0 = arith.constant 0 : i32
    %c0_i32_1 = arith.constant 0 : i32
    return %c0_i32, %c0_i32_0 : i32, i32
  }
  func.func @transform_2(%arg0: i32) -> (i32, i32) {
    %c0_i32 = arith.constant 0 : i32
    %c0_i32_0 = arith.constant 0 : i32
    %c0_i32_1 = arith.constant 0 : i32
    return %c0_i32, %c0_i32_0 : i32, i32
  }
  func.func @transform_3(%arg0: i32) -> (i32, i32, i32) {
    %c0_i32 = arith.constant 0 : i32
    %c0_i32_0 = arith.constant 0 : i32
    %c0_i32_1 = arith.constant 0 : i32
    return %arg0, %c0_i32, %c0_i32_0 : i32, i32, i32
  }
}

</mosaic_0001>

<llo_original>
// kernel: tpu_custom_call.1
$region0: #{tpu_custom_call.1}
  #allocation0 [shape = 'u32[]', space=smem, size = 0x4, offset = 0x4, fixed_abs, tag = 'smem constant byte address 0x4 - core index']
  #allocation1 [shape = 'u32[144,128]{1,0:T(1,128)}', space=vmem, size = 0x12000, scoped, tag = 'internal scratch']
  #allocation2 [shape = 'f32[1,1]{1,0:T(1,128)S(1)}', space=vmem, size = 0x200, scoped, tag = 'scoped memory for tpu_custom_call.1']
  %s0 = inlined_call_operand.hbm [shape: f32[16,32], index: 0, kind: input, shape index: {}]
  %s1 = inlined_call_operand.vmem [shape: f32[1,32], index: 1, kind: input, shape index: {}]
  %s2 = inlined_call_operand.<no memory space> [shape: f32[1,1], index: 2, kind: input, shape index: {}]
  %s3 = inlined_call_operand.hbm [shape: f32[2,1,8], index: 3, kind: output, shape index: {}]
  %s4 = sld [smem:[#allocation0]]
  $region49: #{tpu_custom_call.1} parent=0
    _
  %s6 = ssub.s32 1, %s4
  %s7 = scalar_select 0, %s6, %s4
  %v8 = vstv %s2
  %9 = vst [vmem:[#allocation2] sm:$0x1] %v8
  $region1: #{tpu_custom_call.1} parent=0
    #allocation3 [shape = 'u8[8192]{0}', space=vmem, size = 0x2000, scoped, tag = 'input window, operand 0']
    #allocation4 [shape = 's32[2]{0}', space=sflag, size = 0x8, scoped, tag = 'scoped memory for tpu_custom_call.1']
    #allocation5 [shape = 's32[2]{0}', space=sflag, size = 0x8, scoped, tag = 'scoped memory for tpu_custom_call.1']
    #allocation6 [shape = 'u8[1024]{0}', space=vmem, size = 0x400, scoped, tag = 'output window, operand 0']
    %10 = vsyncpa [#allocation4], 0
    %s11 = scalar_lea.sflag [#allocation4], 1
    %12 = vsyncpa %s11, 0
    %13 = vsyncpa [#allocation5], 0
    %s14 = scalar_lea.sflag [#allocation5], 1
    %15 = vsyncpa %s14, 0
    loop: start=0, step=1, limit=4
    $region2: #{tpu_custom_call.1} parent=1 // loop_pre_header
      _
    $region3: #{tpu_custom_call.1} parent=1 // loop_header
      %s17 = sphi 0, %s21
      %p18 = scmp.ge.s32.totalorder %s17, 4
      %s27 = sphi 0, %s29
      %s30 = sphi 0, %s27
      %s31 = sphi 0, %s30
      %s47 = sphi 0, %s31
      %s51 = sphi 0, %s51
      %s53 = sphi 0, %s51
      %s54 = sphi 0, %s53
      %s68 = sphi 0, %s54
      %s72 = sphi 0, %s72
      %s74 = sphi 0, %s72
      %s75 = sphi 0, %s74
      %s89 = sphi 0, %s75
      %s95 = sphi 0, %s97
      %s98 = sphi 0, %s95
      %s99 = sphi 0, %s98
      %s115 = sphi 0, %s99
    $region4: #{tpu_custom_call.1} parent=1 // loop_header_branch
      %20 = sbr.rel (%p18) target = $region8
    $region5: #{tpu_custom_call.1} parent=1 // loop_body
      %s22 = ssub.s32 %s17, 1
      %s23 = ssub.s32 %s17, 2
      %s24 = sadd.s32 %s17, 1
      %s25 = ssub.s32 %s17, %s24
      %p26 = scmp.eq.s32.totalorder %s25, 0
      %s28 = sadd.s32 %s27, 1
      %s29 = scalar_select %p26, %s27, %s28
      %p32 = pneg %p26
      %p33 = scmp.eq.s32.totalorder %s17, 1
      %p34 = por %p32, %p33
      %p35 = scmp.ne.s32.totalorder %s27, %s30
      %p36 = scmp.eq.s32.totalorder %s17, 0
      %p37 = por %p35, %p36
      %p38 = scmp.ne.s32.totalorder %s27, %s30
      %p39 = scmp.eq.s32.totalorder %s22, 1
      %p40 = por %p38, %p39
      %p41 = scmp.ne.s32.totalorder %s30, %s31
      %p42 = scmp.eq.s32.totalorder %s22, 0
      %p43 = por %p41, %p42
      %p44 = scmp.ne.s32.totalorder %s30, %s31
      %p45 = scmp.eq.s32.totalorder %s23, 1
      %p46 = por %p44, %p45
      %p48 = scmp.ne.s32.totalorder %s31, %s47
      %p49 = scmp.eq.s32.totalorder %s23, 0
      %p50 = por %p48, %p49
      %s52 = sadd.s32 %s51, 1
      %p55 = scmp.eq.s32.totalorder %s17, 1
      %p56 = scmp.ne.s32.totalorder %s51, %s53
      %p57 = scmp.eq.s32.totalorder %s17, 0
      %p58 = por %p56, %p57
      %p59 = scmp.ne.s32.totalorder %s51, %s53
      %p60 = scmp.eq.s32.totalorder %s22, 1
      %p61 = por %p59, %p60
      %p62 = scmp.ne.s32.totalorder %s53, %s54
      %p63 = scmp.eq.s32.totalorder %s22, 0
      %p64 = por %p62, %p63
      %p65 = scmp.ne.s32.totalorder %s53, %s54
      %p66 = scmp.eq.s32.totalorder %s23, 1
      %p67 = por %p65, %p66
      %p69 = scmp.ne.s32.totalorder %s54, %s68
      %p70 = scmp.eq.s32.totalorder %s23, 0
      %p71 = por %p69, %p70
      %s73 = sadd.s32 %s72, 1
      %p76 = scmp.eq.s32.totalorder %s17, 1
      %p77 = scmp.ne.s32.totalorder %s72, %s74
      %p78 = scmp.eq.s32.totalorder %s17, 0
      %p79 = por %p77, %p78
      %p80 = scmp.ne.s32.totalorder %s72, %s74
      %p81 = scmp.eq.s32.totalorder %s22, 1
      %p82 = por %p80, %p81
      %p83 = scmp.ne.s32.totalorder %s74, %s75
      %p84 = scmp.eq.s32.totalorder %s22, 0
      %p85 = por %p83, %p84
      %p86 = scmp.ne.s32.totalorder %s74, %s75
      %p87 = scmp.eq.s32.totalorder %s23, 1
      %p88 = por %p86, %p87
      %p90 = scmp.ne.s32.totalorder %s75, %s89
      %p91 = scmp.eq.s32.totalorder %s23, 0
      %p92 = por %p90, %p91
      %s93 = ssub.s32 %s17, %s24
      %p94 = scmp.eq.s32.totalorder %s93, 0
      %s96 = sadd.s32 %s95, 1
      %s97 = scalar_select %p94, %s95, %s96
      %p100 = pneg %p94
      %p101 = scmp.eq.s32.totalorder %s17, 1
      %p102 = por %p100, %p101
      %p103 = scmp.ne.s32.totalorder %s95, %s98
      %p104 = scmp.eq.s32.totalorder %s17, 0
      %p105 = por %p103, %p104
      %p106 = scmp.ne.s32.totalorder %s95, %s98
      %p107 = scmp.eq.s32.totalorder %s22, 1
      %p108 = por %p106, %p107
      %p109 = scmp.ne.s32.totalorder %s98, %s99
      %p110 = scmp.eq.s32.totalorder %s22, 0
      %p111 = por %p109, %p110
      %p112 = scmp.ne.s32.totalorder %s98, %s99
      %p113 = scmp.eq.s32.totalorder %s23, 1
      %p114 = por %p112, %p113
      %p116 = scmp.ne.s32.totalorder %s99, %s115
      %p117 = scmp.eq.s32.totalorder %s23, 0
      %p118 = por %p116, %p117
      %p119 = scmp.le.s32.totalorder 1, %s17
      %p120 = scmp.lt.s32.totalorder %s17, 3
      %p121 = pnand %p119, %p120
      %p122 = pneg %p121
      // Predicated region
      $region9: #{tpu_custom_call.1} parent=5 // pred_check
        _
      $region10: #{tpu_custom_call.1} parent=5 // pred_check_branch
        %124 = sbr.rel (%p121) target = $region12
      $region11: #{tpu_custom_call.1} parent=5 // pred_region
        %s125 = ssub.s32 %s17, 1
        // Predicated region
        $region13: #{tpu_custom_call.1} parent=11 // pred_check
          %p126 = pneg %p64
        $region14: #{tpu_custom_call.1} parent=11 // pred_check_branch
          %128 = sbr.rel (%p126) target = $region16
        $region15: #{tpu_custom_call.1} parent=11 // pred_region
          _
        $region16: #{tpu_custom_call.1} parent=11 // pred_fallthru
          _
        // Predicated region
        $region17: #{tpu_custom_call.1} parent=11 // pred_check
          %p129 = pneg %p85
        $region18: #{tpu_custom_call.1} parent=11 // pred_check_branch
          %131 = sbr.rel (%p129) target = $region20
        $region19: #{tpu_custom_call.1} parent=11 // pred_region
          _
        $region20: #{tpu_custom_call.1} parent=11 // pred_fallthru
          _
      $region12: #{tpu_custom_call.1} parent=5 // pred_fallthru
        _
      %p132 = scmp.lt.s32.totalorder %s17, 2
      // Predicated region
      $region21: #{tpu_custom_call.1} parent=5 // pred_check
        %p133 = pneg %p132
      $region22: #{tpu_custom_call.1} parent=5 // pred_check_branch
        %135 = sbr.rel (%p133) target = $region24
      $region23: #{tpu_custom_call.1} parent=5 // pred_region
        // Predicated region
        $region25: #{tpu_custom_call.1} parent=23 // pred_check
          %p136 = pneg %p37
        $region26: #{tpu_custom_call.1} parent=23 // pred_check_branch
          %138 = sbr.rel (%p136) target = $region28
        $region27: #{tpu_custom_call.1} parent=23 // pred_region
          %s139 = sand.u32 %s27, 1
          %s140 = scalar_lea.sflag [#allocation4], %s139
          %s141 = sand.u32 %s27, 1
          %s142 = smul.addr %s141, 8
          %s143 = scalar_lea.vmem [#allocation3], %s142
          %s145 = ssub.s32 128, 128
          %146 = vsyncadd %s140, %s145
          %s147 = smul.addr %s17, 128
          %s148 = scalar_lea.hbm %s0, %s147
          %s150 = sshll.u32 %s143, 4
          %s151 = int_to_ptr.vmem [resolvable:$true] %s150
          %153 = dma.hbm_to_vmem [thread:$0]  %s148, 128, %s151, %s140
        $region28: #{tpu_custom_call.1} parent=23 // pred_fallthru
          _
      $region24: #{tpu_custom_call.1} parent=5 // pred_fallthru
        _
      %p154 = scmp.le.s32.totalorder 1, %s17
      %p155 = scmp.lt.s32.totalorder %s17, 3
      %p156 = pnand %p154, %p155
      %p157 = pneg %p156
      // Predicated region
      $region29: #{tpu_custom_call.1} parent=5 // pred_check
        _
      $region30: #{tpu_custom_call.1} parent=5 // pred_check_branch
        %159 = sbr.rel (%p156) target = $region32
      $region31: #{tpu_custom_call.1} parent=5 // pred_region
        %s160 = ssub.s32 %s17, 1
        %s161 = sand.u32 %s30, 1
        %s162 = scalar_lea.sflag [#allocation4], %s161
        %s163 = sand.u32 %s30, 1
        %s164 = smul.addr %s163, 8
        %s165 = scalar_lea.vmem [#allocation3], %s164
        // Predicated region
        $region33: #{tpu_custom_call.1} parent=31 // pred_check
          %p166 = pneg %p43
        $region34: #{tpu_custom_call.1} parent=31 // pred_check_branch
          %168 = sbr.rel (%p166) target = $region36
        $region35: #{tpu_custom_call.1} parent=31 // pred_region
          %169 = dma.done %s162, 128
        $region36: #{tpu_custom_call.1} parent=31 // pred_fallthru
          _
        %s170 = sand.u32 %s30, 1
        %s171 = scalar_lea.sflag [#allocation4], %s170
        %s172 = sand.u32 %s30, 1
        %s173 = smul.addr %s172, 8
        %s174 = scalar_lea.vmem [#allocation3], %s173
        %p175 = pneg %p43
        %p176 = pneg %p40
        %p177 = pneg %p64
        %p178 = pneg %p61
        %p179 = pneg %p85
        %p180 = pneg %p82
        %p181 = pneg %p111
        %p182 = pneg %p108
        %s183 = sand.u32 %s98, 1
        %s184 = scalar_lea.sflag [#allocation5], %s183
        %s185 = sand.u32 %s98, 1
        %s186 = scalar_lea.vmem [#allocation6], %s185
        %v187 = vld [vmem:[%s1] sm:$0x1]
        %v188 = vld [vmem:[%s165] sm:$0xff]
        %v189 = vld [vmem:[#allocation2] sm:$0x1]
        %191 = vset.pattern.permute.xlu0 0
        %192 = vperm.xlu0 %191, %v189
        %v193 = vpop.permute.xlu0 %192
        %v195 = vlaneseq
        %v196 = vshrl.u32 %v195, 7
        %v197 = vsub.s32 0, %v196
        %v198 = vrot.slane %v193, %v197
        %vm199 = vcmask 261120
        %v201 = vsel %vm199, %v187, 0
        %v204 = vsel %vm199, %v188, 0
        %206 = vmatprep.subr.mxu0 0.0
        %v207 = vand.u32 %v204, 4294901760
        %208 = vmatpush1.xpose.msra.mxu0 %v207
        %209 = vmatprep.subr.mxu0 0.0
        %210 = vmatpush1.xpose.msra.mxu0 0.0
        %211 = vmatprep.subr.mxu0 0.0
        %212 = vmatpush1.xpose.msra.mxu0 0.0
        %213 = vmatprep.subr.mxu0 0.0
        %214 = vmatpush1.xpose.msra.mxu0 0.0
        %215 = vmatprep.subr.mxu0 0.0
        %216 = vmatpush1.xpose.msra.mxu0 0.0
        %217 = vmatprep.subr.mxu0 0.0
        %218 = vmatpush1.xpose.msra.mxu0 0.0
        %219 = vmatprep.subr.mxu0 0.0
        %220 = vmatpush1.xpose.msra.mxu0 0.0
        %221 = vmatprep.subr.mxu0 0.0
        %222 = vmatpush1.xpose.msra.mxu0 0.0
        %223 = vmatprep.subr.mxu0 0.0
        %224 = vmatpush1.xpose.msra.mxu0 0.0
        %225 = vmatprep.subr.mxu0 0.0
        %226 = vmatpush1.xpose.msra.mxu0 0.0
        %227 = vmatprep.subr.mxu0 0.0
        %228 = vmatpush1.xpose.msra.mxu0 0.0
        %229 = vmatprep.subr.mxu0 0.0
        %230 = vmatpush1.xpose.msra.mxu0 0.0
        %231 = vmatprep.subr.mxu0 0.0
        %232 = vmatpush1.xpose.msra.mxu0 0.0
        %233 = vmatprep.subr.mxu0 0.0
        %234 = vmatpush1.xpose.msra.mxu0 0.0
        %235 = vmatprep.subr.mxu0 0.0
        %236 = vmatpush1.xpose.msra.mxu0 0.0
        %237 = vmatprep.subr.mxu0 0.0
        %238 = vmatpush1.xpose.msra.mxu0 0.0
        %239 = vmatprep.subr.mxu0 0.0
        %240 = vmatpush1.xpose.msra.mxu0 0.0
        %241 = vmatprep.subr.mxu0 0.0
        %242 = vmatpush1.xpose.msra.mxu0 0.0
        %243 = vmatprep.subr.mxu0 0.0
        %244 = vmatpush1.xpose.msra.mxu0 0.0
        %245 = vmatprep.subr.mxu0 0.0
        %246 = vmatpush1.xpose.msra.mxu0 0.0
        %247 = vmatprep.subr.mxu0 0.0
        %248 = vmatpush1.xpose.msra.mxu0 0.0
        %249 = vmatprep.subr.mxu0 0.0
        %250 = vmatpush1.xpose.msra.mxu0 0.0
        %251 = vmatprep.subr.mxu0 0.0
        %252 = vmatpush1.xpose.msra.mxu0 0.0
        %253 = vmatprep.subr.mxu0 0.0
        %254 = vmatpush1.xpose.msra.mxu0 0.0
        %255 = vmatprep.subr.mxu0 0.0
        %256 = vmatpush1.xpose.msra.mxu0 0.0
        %257 = vmatprep.subr.mxu0 0.0
        %258 = vmatpush1.xpose.msra.mxu0 0.0
        %259 = vmatprep.subr.mxu0 0.0
        %260 = vmatpush1.xpose.msra.mxu0 0.0
        %261 = vmatprep.subr.mxu0 0.0
        %262 = vmatpush1.xpose.msra.mxu0 0.0
        %263 = vmatprep.subr.mxu0 0.0
        %264 = vmatpush1.xpose.msra.mxu0 0.0
        %265 = vmatprep.subr.mxu0 0.0
        %266 = vmatpush1.xpose.msra.mxu0 0.0
        %267 = vmatprep.subr.mxu0 0.0
        %268 = vmatpush1.xpose.msra.mxu0 0.0
        %269 = vmatprep.subr.mxu0 0.0
        %270 = vmatpush1.xpose.msra.mxu0 0.0
        %271 = vmatprep.mubr.f32.mxu0 0.0
        %v272 = vand.u32 %v201, 4294901760
        %v273 = vsub.f32 %v201, %v272
        %v274 = vand.u32 %v273, 4294901760
        %v275 = vsub.f32 %v273, %v274
        %v276 = vand.u32 %v275, 4294901760
        %277 = vmatmul.mubr.f32.gmra.mrb[0].mxu0 %v276
        %v278 = vpop.f32.mrb[0].mxu0
        %v279 = vadd.f32 %v198, %v278
        %v280 = vpop.f32.mrb[0].mxu0
        %281 = vdwg.mxu0
        %282 = vmatprep.subr.mxu0 0.0
        %v283 = vand.u32 %v204, 4294901760
        %v284 = vsub.f32 %v204, %v283
        %v285 = vand.u32 %v284, 4294901760
        %v286 = vsub.f32 %v284, %v285
        %v287 = vand.u32 %v286, 4294901760
        %288 = vmatpush1.xpose.msra.mxu0 %v287
        %289 = vmatprep.subr.mxu0 0.0
        %290 = vmatpush1.xpose.msra.mxu0 0.0
        %291 = vmatprep.subr.mxu0 0.0
        %292 = vmatpush1.xpose.msra.mxu0 0.0
        %293 = vmatprep.subr.mxu0 0.0
        %294 = vmatpush1.xpose.msra.mxu0 0.0
        %295 = vmatprep.subr.mxu0 0.0
        %296 = vmatpush1.xpose.msra.mxu0 0.0
        %297 = vmatprep.subr.mxu0 0.0
        %298 = vmatpush1.xpose.msra.mxu0 0.0
        %299 = vmatprep.subr.mxu0 0.0
        %300 = vmatpush1.xpose.msra.mxu0 0.0
        %301 = vmatprep.subr.mxu0 0.0
        %302 = vmatpush1.xpose.msra.mxu0 0.0
        %303 = vmatprep.subr.mxu0 0.0
        %304 = vmatpush1.xpose.msra.mxu0 0.0
        %305 = vmatprep.subr.mxu0 0.0
        %306 = vmatpush1.xpose.msra.mxu0 0.0
        %307 = vmatprep.subr.mxu0 0.0
        %308 = vmatpush1.xpose.msra.mxu0 0.0
        %309 = vmatprep.subr.mxu0 0.0
        %310 = vmatpush1.xpose.msra.mxu0 0.0
        %311 = vmatprep.subr.mxu0 0.0
        %312 = vmatpush1.xpose.msra.mxu0 0.0
        %313 = vmatprep.subr.mxu0 0.0
        %314 = vmatpush1.xpose.msra.mxu0 0.0
        %315 = vmatprep.subr.mxu0 0.0
        %316 = vmatpush1.xpose.msra.mxu0 0.0
        %317 = vmatprep.subr.mxu0 0.0
        %318 = vmatpush1.xpose.msra.mxu0 0.0
        %319 = vmatprep.subr.mxu0 0.0
        %320 = vmatpush1.xpose.msra.mxu0 0.0
        %321 = vmatprep.subr.mxu0 0.0
        %322 = vmatpush1.xpose.msra.mxu0 0.0
        %323 = vmatprep.subr.mxu0 0.0
        %324 = vmatpush1.xpose.msra.mxu0 0.0
        %325 = vmatprep.subr.mxu0 0.0
        %326 = vmatpush1.xpose.msra.mxu0 0.0
        %327 = vmatprep.subr.mxu0 0.0
        %328 = vmatpush1.xpose.msra.mxu0 0.0
        %329 = vmatprep.subr.mxu0 0.0
        %330 = vmatpush1.xpose.msra.mxu0 0.0
        %331 = vmatprep.subr.mxu0 0.0
        %332 = vmatpush1.xpose.msra.mxu0 0.0
        %333 = vmatprep.subr.mxu0 0.0
        %334 = vmatpush1.xpose.msra.mxu0 0.0
        %335 = vmatprep.subr.mxu0 0.0
        %336 = vmatpush1.xpose.msra.mxu0 0.0
        %337 = vmatprep.subr.mxu0 0.0
        %338 = vmatpush1.xpose.msra.mxu0 0.0
        %339 = vmatprep.subr.mxu0 0.0
        %340 = vmatpush1.xpose.msra.mxu0 0.0
        %341 = vmatprep.subr.mxu0 0.0
        %342 = vmatpush1.xpose.msra.mxu0 0.0
        %343 = vmatprep.subr.mxu0 0.0
        %344 = vmatpush1.xpose.msra.mxu0 0.0
        %345 = vmatprep.subr.mxu0 0.0
        %346 = vmatpush1.xpose.msra.mxu0 0.0
        %347 = vmatprep.subr.mxu0 0.0
        %348 = vmatpush1.xpose.msra.mxu0 0.0
        %349 = vmatprep.subr.mxu0 0.0
        %350 = vmatpush1.xpose.msra.mxu0 0.0
        %351 = vmatprep.mubr.f32.mxu0 0.0
        %v352 = vand.u32 %v201, 4294901760
        %353 = vmatmul.mubr.f32.gmra.mrb[0].mxu0 %v352
        %v354 = vpop.f32.mrb[0].mxu0
        %v355 = vadd.f32 %v279, %v354
        %v356 = vpop.f32.mrb[0].mxu0
        %357 = vdwg.mxu0
        %358 = vmatprep.subr.mxu0 0.0
        %v359 = vand.u32 %v204, 4294901760
        %v360 = vsub.f32 %v204, %v359
        %361 = vmatpush1.xpose.msra.mxu0 %v360
        %362 = vmatprep.subr.mxu0 0.0
        %363 = vmatpush1.xpose.msra.mxu0 0.0
        %364 = vmatprep.subr.mxu0 0.0
        %365 = vmatpush1.xpose.msra.mxu0 0.0
        %366 = vmatprep.subr.mxu0 0.0
        %367 = vmatpush1.xpose.msra.mxu0 0.0
        %368 = vmatprep.subr.mxu0 0.0
        %369 = vmatpush1.xpose.msra.mxu0 0.0
        %370 = vmatprep.subr.mxu0 0.0
        %371 = vmatpush1.xpose.msra.mxu0 0.0
        %372 = vmatprep.subr.mxu0 0.0
        %373 = vmatpush1.xpose.msra.mxu0 0.0
        %374 = vmatprep.subr.mxu0 0.0
        %375 = vmatpush1.xpose.msra.mxu0 0.0
        %376 = vmatprep.subr.mxu0 0.0
        %377 = vmatpush1.xpose.msra.mxu0 0.0
        %378 = vmatprep.subr.mxu0 0.0
        %379 = vmatpush1.xpose.msra.mxu0 0.0
        %380 = vmatprep.subr.mxu0 0.0
        %381 = vmatpush1.xpose.msra.mxu0 0.0
        %382 = vmatprep.subr.mxu0 0.0
        %383 = vmatpush1.xpose.msra.mxu0 0.0
        %384 = vmatprep.subr.mxu0 0.0
        %385 = vmatpush1.xpose.msra.mxu0 0.0
        %386 = vmatprep.subr.mxu0 0.0
        %387 = vmatpush1.xpose.msra.mxu0 0.0
        %388 = vmatprep.subr.mxu0 0.0
        %389 = vmatpush1.xpose.msra.mxu0 0.0
        %390 = vmatprep.subr.mxu0 0.0
        %391 = vmatpush1.xpose.msra.mxu0 0.0
        %392 = vmatprep.subr.mxu0 0.0
        %393 = vmatpush1.xpose.msra.mxu0 0.0
        %394 = vmatprep.subr.mxu0 0.0
        %395 = vmatpush1.xpose.msra.mxu0 0.0
        %396 = vmatprep.subr.mxu0 0.0
        %397 = vmatpush1.xpose.msra.mxu0 0.0
        %398 = vmatprep.subr.mxu0 0.0
        %399 = vmatpush1.xpose.msra.mxu0 0.0
        %400 = vmatprep.subr.mxu0 0.0
        %401 = vmatpush1.xpose.msra.mxu0 0.0
        %402 = vmatprep.subr.mxu0 0.0
        %403 = vmatpush1.xpose.msra.mxu0 0.0
        %404 = vmatprep.subr.mxu0 0.0
        %405 = vmatpush1.xpose.msra.mxu0 0.0
        %406 = vmatprep.subr.mxu0 0.0
        %407 = vmatpush1.xpose.msra.mxu0 0.0
        %408 = vmatprep.subr.mxu0 0.0
        %409 = vmatpush1.xpose.msra.mxu0 0.0
        %410 = vmatprep.subr.mxu0 0.0
        %411 = vmatpush1.xpose.msra.mxu0 0.0
        %412 = vmatprep.subr.mxu0 0.0
        %413 = vmatpush1.xpose.msra.mxu0 0.0
        %414 = vmatprep.subr.mxu0 0.0
        %415 = vmatpush1.xpose.msra.mxu0 0.0
        %416 = vmatprep.subr.mxu0 0.0
        %417 = vmatpush1.xpose.msra.mxu0 0.0
        %418 = vmatprep.subr.mxu0 0.0
        %419 = vmatpush1.xpose.msra.mxu0 0.0
        %420 = vmatprep.subr.mxu0 0.0
        %421 = vmatpush1.xpose.msra.mxu0 0.0
        %422 = vmatprep.subr.mxu0 0.0
        %423 = vmatpush1.xpose.msra.mxu0 0.0
        %424 = vmatprep.mubr.f32.mxu0 0.0
        %v425 = vand.u32 %v201, 4294901760
        %v426 = vsub.f32 %v201, %v425
        %427 = vmatmul.mubr.f32.gmra.mrb[0].mxu0 %v426
        %v428 = vpop.f32.mrb[0].mxu0
        %v429 = vadd.f32 %v355, %v428
        %v430 = vpop.f32.mrb[0].mxu0
        %431 = vdwg.mxu0
        %432 = vmatprep.subr.mxu0 0.0
        %v433 = vand.u32 %v204, 4294901760
        %434 = vmatpush1.xpose.msra.mxu0 %v433
        %435 = vmatprep.subr.mxu0 0.0
        %436 = vmatpush1.xpose.msra.mxu0 0.0
        %437 = vmatprep.subr.mxu0 0.0
        %438 = vmatpush1.xpose.msra.mxu0 0.0
        %439 = vmatprep.subr.mxu0 0.0
        %440 = vmatpush1.xpose.msra.mxu0 0.0
        %441 = vmatprep.subr.mxu0 0.0
        %442 = vmatpush1.xpose.msra.mxu0 0.0
        %443 = vmatprep.subr.mxu0 0.0
        %444 = vmatpush1.xpose.msra.mxu0 0.0
        %445 = vmatprep.subr.mxu0 0.0
        %446 = vmatpush1.xpose.msra.mxu0 0.0
        %447 = vmatprep.subr.mxu0 0.0
        %448 = vmatpush1.xpose.msra.mxu0 0.0
        %449 = vmatprep.subr.mxu0 0.0
        %450 = vmatpush1.xpose.msra.mxu0 0.0
        %451 = vmatprep.subr.mxu0 0.0
        %452 = vmatpush1.xpose.msra.mxu0 0.0
        %453 = vmatprep.subr.mxu0 0.0
        %454 = vmatpush1.xpose.msra.mxu0 0.0
        %455 = vmatprep.subr.mxu0 0.0
        %456 = vmatpush1.xpose.msra.mxu0 0.0
        %457 = vmatprep.subr.mxu0 0.0
        %458 = vmatpush1.xpose.msra.mxu0 0.0
        %459 = vmatprep.subr.mxu0 0.0
        %460 = vmatpush1.xpose.msra.mxu0 0.0
        %461 = vmatprep.subr.mxu0 0.0
        %462 = vmatpush1.xpose.msra.mxu0 0.0
        %463 = vmatprep.subr.mxu0 0.0
        %464 = vmatpush1.xpose.msra.mxu0 0.0
        %465 = vmatprep.subr.mxu0 0.0
        %466 = vmatpush1.xpose.msra.mxu0 0.0
        %467 = vmatprep.subr.mxu0 0.0
        %468 = vmatpush1.xpose.msra.mxu0 0.0
        %469 = vmatprep.subr.mxu0 0.0
        %470 = vmatpush1.xpose.msra.mxu0 0.0
        %471 = vmatprep.subr.mxu0 0.0
        %472 = vmatpush1.xpose.msra.mxu0 0.0
        %473 = vmatprep.subr.mxu0 0.0
        %474 = vmatpush1.xpose.msra.mxu0 0.0
        %475 = vmatprep.subr.mxu0 0.0
        %476 = vmatpush1.xpose.msra.mxu0 0.0
        %477 = vmatprep.subr.mxu0 0.0
        %478 = vmatpush1.xpose.msra.mxu0 0.0
        %479 = vmatprep.subr.mxu0 0.0
        %480 = vmatpush1.xpose.msra.mxu0 0.0
        %481 = vmatprep.subr.mxu0 0.0
        %482 = vmatpush1.xpose.msra.mxu0 0.0
        %483 = vmatprep.subr.mxu0 0.0
        %484 = vmatpush1.xpose.msra.mxu0 0.0
        %485 = vmatprep.subr.mxu0 0.0
        %486 = vmatpush1.xpose.msra.mxu0 0.0
        %487 = vmatprep.subr.mxu0 0.0
        %488 = vmatpush1.xpose.msra.mxu0 0.0
        %489 = vmatprep.subr.mxu0 0.0
        %490 = vmatpush1.xpose.msra.mxu0 0.0
        %491 = vmatprep.subr.mxu0 0.0
        %492 = vmatpush1.xpose.msra.mxu0 0.0
        %493 = vmatprep.subr.mxu0 0.0
        %494 = vmatpush1.xpose.msra.mxu0 0.0
        %495 = vmatprep.subr.mxu0 0.0
        %496 = vmatpush1.xpose.msra.mxu0 0.0
        %497 = vmatprep.mubr.f32.mxu0 0.0
        %v498 = vand.u32 %v201, 4294901760
        %v499 = vsub.f32 %v201, %v498
        %v500 = vand.u32 %v499, 4294901760
        %501 = vmatmul.mubr.f32.gmra.mrb[0].mxu0 %v500
        %v502 = vpop.f32.mrb[0].mxu0
        %v503 = vadd.f32 %v429, %v502
        %v504 = vpop.f32.mrb[0].mxu0
        %505 = vdwg.mxu0
        %506 = vmatprep.subr.mxu0 0.0
        %v507 = vand.u32 %v204, 4294901760
        %v508 = vsub.f32 %v204, %v507
        %v509 = vand.u32 %v508, 4294901760
        %510 = vmatpush1.xpose.msra.mxu0 %v509
        %511 = vmatprep.subr.mxu0 0.0
        %512 = vmatpush1.xpose.msra.mxu0 0.0
        %513 = vmatprep.subr.mxu0 0.0
        %514 = vmatpush1.xpose.msra.mxu0 0.0
        %515 = vmatprep.subr.mxu0 0.0
        %516 = vmatpush1.xpose.msra.mxu0 0.0
        %517 = vmatprep.subr.mxu0 0.0
        %518 = vmatpush1.xpose.msra.mxu0 0.0
        %519 = vmatprep.subr.mxu0 0.0
        %520 = vmatpush1.xpose.msra.mxu0 0.0
        %521 = vmatprep.subr.mxu0 0.0
        %522 = vmatpush1.xpose.msra.mxu0 0.0
        %523 = vmatprep.subr.mxu0 0.0
        %524 = vmatpush1.xpose.msra.mxu0 0.0
        %525 = vmatprep.subr.mxu0 0.0
        %526 = vmatpush1.xpose.msra.mxu0 0.0
        %527 = vmatprep.subr.mxu0 0.0
        %528 = vmatpush1.xpose.msra.mxu0 0.0
        %529 = vmatprep.subr.mxu0 0.0
        %530 = vmatpush1.xpose.msra.mxu0 0.0
        %531 = vmatprep.subr.mxu0 0.0
        %532 = vmatpush1.xpose.msra.mxu0 0.0
        %533 = vmatprep.subr.mxu0 0.0
        %534 = vmatpush1.xpose.msra.mxu0 0.0
        %535 = vmatprep.subr.mxu0 0.0
        %536 = vmatpush1.xpose.msra.mxu0 0.0
        %537 = vmatprep.subr.mxu0 0.0
        %538 = vmatpush1.xpose.msra.mxu0 0.0
        %539 = vmatprep.subr.mxu0 0.0
        %540 = vmatpush1.xpose.msra.mxu0 0.0
        %541 = vmatprep.subr.mxu0 0.0
        %542 = vmatpush1.xpose.msra.mxu0 0.0
        %543 = vmatprep.subr.mxu0 0.0
        %544 = vmatpush1.xpose.msra.mxu0 0.0
        %545 = vmatprep.subr.mxu0 0.0
        %546 = vmatpush1.xpose.msra.mxu0 0.0
        %547 = vmatprep.subr.mxu0 0.0
        %548 = vmatpush1.xpose.msra.mxu0 0.0
        %549 = vmatprep.subr.mxu0 0.0
        %550 = vmatpush1.xpose.msra.mxu0 0.0
        %551 = vmatprep.subr.mxu0 0.0
        %552 = vmatpush1.xpose.msra.mxu0 0.0
        %553 = vmatprep.subr.mxu0 0.0
        %554 = vmatpush1.xpose.msra.mxu0 0.0
        %555 = vmatprep.subr.mxu0 0.0
        %556 = vmatpush1.xpose.msra.mxu0 0.0
        %557 = vmatprep.subr.mxu0 0.0
        %558 = vmatpush1.xpose.msra.mxu0 0.0
        %559 = vmatprep.subr.mxu0 0.0
        %560 = vmatpush1.xpose.msra.mxu0 0.0
        %561 = vmatprep.subr.mxu0 0.0
        %562 = vmatpush1.xpose.msra.mxu0 0.0
        %563 = vmatprep.subr.mxu0 0.0
        %564 = vmatpush1.xpose.msra.mxu0 0.0
        %565 = vmatprep.subr.mxu0 0.0
        %566 = vmatpush1.xpose.msra.mxu0 0.0
        %567 = vmatprep.subr.mxu0 0.0
        %568 = vmatpush1.xpose.msra.mxu0 0.0
        %569 = vmatprep.subr.mxu0 0.0
        %570 = vmatpush1.xpose.msra.mxu0 0.0
        %571 = vmatprep.subr.mxu0 0.0
        %572 = vmatpush1.xpose.msra.mxu0 0.0
        %573 = vmatprep.mubr.f32.mxu0 0.0
        %v574 = vand.u32 %v201, 4294901760
        %575 = vmatmul.mubr.f32.gmra.mrb[0].mxu0 %v574
        %v576 = vpop.f32.mrb[0].mxu0
        %v577 = vadd.f32 %v503, %v576
        %v578 = vpop.f32.mrb[0].mxu0
        %579 = vdwg.mxu0
        %580 = vmatprep.subr.mxu0 0.0
        %v581 = vand.u32 %v204, 4294901760
        %582 = vmatpush1.xpose.msra.mxu0 %v581
        %583 = vmatprep.subr.mxu0 0.0
        %584 = vmatpush1.xpose.msra.mxu0 0.0
        %585 = vmatprep.subr.mxu0 0.0
        %586 = vmatpush1.xpose.msra.mxu0 0.0
        %587 = vmatprep.subr.mxu0 0.0
        %588 = vmatpush1.xpose.msra.mxu0 0.0
        %589 = vmatprep.subr.mxu0 0.0
        %590 = vmatpush1.xpose.msra.mxu0 0.0
        %591 = vmatprep.subr.mxu0 0.0
        %592 = vmatpush1.xpose.msra.mxu0 0.0
        %593 = vmatprep.subr.mxu0 0.0
        %594 = vmatpush1.xpose.msra.mxu0 0.0
        %595 = vmatprep.subr.mxu0 0.0
        %596 = vmatpush1.xpose.msra.mxu0 0.0
        %597 = vmatprep.subr.mxu0 0.0
        %598 = vmatpush1.xpose.msra.mxu0 0.0
        %599 = vmatprep.subr.mxu0 0.0
        %600 = vmatpush1.xpose.msra.mxu0 0.0
        %601 = vmatprep.subr.mxu0 0.0
        %602 = vmatpush1.xpose.msra.mxu0 0.0
        %603 = vmatprep.subr.mxu0 0.0
        %604 = vmatpush1.xpose.msra.mxu0 0.0
        %605 = vmatprep.subr.mxu0 0.0
        %606 = vmatpush1.xpose.msra.mxu0 0.0
        %607 = vmatprep.subr.mxu0 0.0
        %608 = vmatpush1.xpose.msra.mxu0 0.0
        %609 = vmatprep.subr.mxu0 0.0
        %610 = vmatpush1.xpose.msra.mxu0 0.0
        %611 = vmatprep.subr.mxu0 0.0
        %612 = vmatpush1.xpose.msra.mxu0 0.0
        %613 = vmatprep.subr.mxu0 0.0
        %614 = vmatpush1.xpose.msra.mxu0 0.0
        %615 = vmatprep.subr.mxu0 0.0
        %616 = vmatpush1.xpose.msra.mxu0 0.0
        %617 = vmatprep.subr.mxu0 0.0
        %618 = vmatpush1.xpose.msra.mxu0 0.0
        %619 = vmatprep.subr.mxu0 0.0
        %620 = vmatpush1.xpose.msra.mxu0 0.0
        %621 = vmatprep.subr.mxu0 0.0
        %622 = vmatpush1.xpose.msra.mxu0 0.0
        %623 = vmatprep.subr.mxu0 0.0
        %624 = vmatpush1.xpose.msra.mxu0 0.0
        %625 = vmatprep.subr.mxu0 0.0
        %626 = vmatpush1.xpose.msra.mxu0 0.0
        %627 = vmatprep.subr.mxu0 0.0
        %628 = vmatpush1.xpose.msra.mxu0 0.0
        %629 = vmatprep.subr.mxu0 0.0
        %630 = vmatpush1.xpose.msra.mxu0 0.0
        %631 = vmatprep.subr.mxu0 0.0
        %632 = vmatpush1.xpose.msra.mxu0 0.0
        %633 = vmatprep.subr.mxu0 0.0
        %634 = vmatpush1.xpose.msra.mxu0 0.0
        %635 = vmatprep.subr.mxu0 0.0
        %636 = vmatpush1.xpose.msra.mxu0 0.0
        %637 = vmatprep.subr.mxu0 0.0
        %638 = vmatpush1.xpose.msra.mxu0 0.0
        %639 = vmatprep.subr.mxu0 0.0
        %640 = vmatpush1.xpose.msra.mxu0 0.0
        %641 = vmatprep.subr.mxu0 0.0
        %642 = vmatpush1.xpose.msra.mxu0 0.0
        %643 = vmatprep.subr.mxu0 0.0
        %644 = vmatpush1.xpose.msra.mxu0 0.0
        %645 = vmatprep.mubr.f32.mxu0 0.0
        %v646 = vand.u32 %v201, 4294901760
        %647 = vmatmul.mubr.f32.gmra.mrb[0].mxu0 %v646
        %v648 = vpop.f32.mrb[0].mxu0
        %v649 = vadd.f32 %v577, %v648
        %v650 = vpop.f32.mrb[0].mxu0
        %651 = vdwg.mxu0
        %v652 = vsub.f32 0.0, %v649
        %v653 = vmul.f32 %v652, 1.442695
        %v654 = vpow.pop %v653
        %v655 = vadd.f32 %v654, 1.0
        %v656 = vrcp.pop %v655
        %v657 = vmul.f32 1.0, %v656
        %vm658 = vcmask 57344
        %659 = vst.msk [vmem:[%s186] sm:$0x1] %vm658, %v657
        %s660 = sand.u32 %s98, 1
        %s661 = scalar_lea.sflag [#allocation5], %s660
        %s662 = sand.u32 %s98, 1
        %s663 = scalar_lea.vmem [#allocation6], %s662
        // Predicated region
        $region37: #{tpu_custom_call.1} parent=31 // pred_check
          %p664 = pneg %p108
        $region38: #{tpu_custom_call.1} parent=31 // pred_check_branch
          %666 = sbr.rel (%p664) target = $region40
        $region39: #{tpu_custom_call.1} parent=31 // pred_region
          %s668 = ssub.s32 16, 16
          %669 = vsyncadd %s661, %s668
          %s670 = smul.addr %s22, 16
          %s671 = scalar_lea.hbm %s3, %s670
          %s673 = sshll.u32 %s663, 4
          %s674 = int_to_ptr.vmem [resolvable:$true] %s673
          %676 = dma.vmem_to_hbm [thread:$0]  %s674, 16, %s671, %s661
        $region40: #{tpu_custom_call.1} parent=31 // pred_fallthru
          _
      $region32: #{tpu_custom_call.1} parent=5 // pred_fallthru
        _
      %p677 = scmp.le.s32.totalorder 2, %s17
      // Predicated region
      $region41: #{tpu_custom_call.1} parent=5 // pred_check
        %p678 = pneg %p677
      $region42: #{tpu_custom_call.1} parent=5 // pred_check_branch
        %680 = sbr.rel (%p678) target = $region44
      $region43: #{tpu_custom_call.1} parent=5 // pred_region
        %s681 = ssub.s32 %s17, 2
        // Predicated region
        $region45: #{tpu_custom_call.1} parent=43 // pred_check
          %p682 = pneg %p114
        $region46: #{tpu_custom_call.1} parent=43 // pred_check_branch
          %684 = sbr.rel (%p682) target = $region48
        $region47: #{tpu_custom_call.1} parent=43 // pred_region
          %s685 = sand.u32 %s99, 1
          %s686 = scalar_lea.sflag [#allocation5], %s685
          %s687 = sand.u32 %s99, 1
          %s688 = scalar_lea.vmem [#allocation6], %s687
          %689 = dma.done %s686, 16
        $region48: #{tpu_custom_call.1} parent=43 // pred_fallthru
          _
      $region44: #{tpu_custom_call.1} parent=5 // pred_fallthru
        _
    $region6: #{tpu_custom_call.1} parent=1 // loop_footer
      %s21 = sadd.s32 1, %s17
    $region7: #{tpu_custom_call.1} parent=1 // loop_footer_branch
      %16 = sbr.rel target = $region3
    $region8: #{tpu_custom_call.1} parent=1 // loop_exit
      _
    %690 = vsyncpa [#allocation4], 1
    %s691 = scalar_lea.sflag [#allocation4], 1
    %692 = vsyncpa %s691, 1
    %693 = vsyncpa [#allocation5], 1
    %s694 = scalar_lea.sflag [#allocation5], 1
    %695 = vsyncpa %s694, 1

</llo_original>
